<compile_context>
chip_gen: v7x
topology: tpu7x:2x2x1
jax: 0.10.0
libtpu: 0.0.40
codegen_flags: <defaults>
</compile_context>

<pallas_src>
import functools

import jax
import jax.numpy as jnp
from jax.experimental import pallas as pl
from jax.experimental.pallas import tpu as pltpu

EPS = 1e-5
LANE = 128
SUBLANE = 8


def _round_up(x, m):
    return ((x + m - 1) // m) * m


# ---------------------------------------------------------------------------
# Fused kernel.
#   grid = (phase, row-tile).  phase 0: accumulate per-channel sum / sumsq of
#   the conv output (kept in VMEM scratch).  phase 1, tile 0: fold BN into a
#   per-channel scale/shift; every phase-1 tile: recompute the cheap matmul
#   (K is tiny, MXU has huge slack) and store the normalized, channel-major,
#   lane-dense result.
# ---------------------------------------------------------------------------
def _conv_bn_fused_kernel(p_ref, w_ref, g_ref, bt_ref, o_ref,
                          psum_ref, psq_ref, scale_ref, shift_ref, *,
                          m_true, eps):
    ph = pl.program_id(0)      # 0 = stats pass, 1 = normalize + write pass
    i = pl.program_id(1)       # pixel (row) tile

    @pl.when(jnp.logical_and(ph == 0, i == 0))
    def _():
        psum_ref[...] = jnp.zeros_like(psum_ref)
        psq_ref[...] = jnp.zeros_like(psq_ref)

    # (c8, kp8) @ (kp8, tm) -> (c8, tm): channel-major, pixels on lanes.
    y = jnp.dot(w_ref[...], p_ref[...], preferred_element_type=jnp.float32)

    @pl.when(ph == 0)
    def _():
        # Zero-padded pixel columns contribute 0 to both sums -> no mask needed.
        psum_ref[...] += jnp.sum(y, axis=1, keepdims=True)
        psq_ref[...] += jnp.sum(y * y, axis=1, keepdims=True)

    @pl.when(jnp.logical_and(ph == 1, i == 0))
    def _():
        inv_m = 1.0 / m_true
        mean = psum_ref[...] * inv_m                         # mean of bias-free conv
        var = jnp.maximum(psq_ref[...] * inv_m - mean * mean, 0.0)
        s = g_ref[...] * jax.lax.rsqrt(var + eps)            # EUP slot
        scale_ref[...] = s
        shift_ref[...] = bt_ref[...] - mean * s              # conv bias cancels in BN

    @pl.when(ph == 1)
    def _():
        o_ref[...] = (y * scale_ref[...] + shift_ref[...]).astype(o_ref.dtype)


# ---------------------------------------------------------------------------
# Host-side glue.
# ---------------------------------------------------------------------------
def _im2col_km(x_nchw, kh, kw, stride, padding):
    """im2col directly in (K, M) layout.  K order = (c, i, j), M = N*OH*OW on lanes."""
    n, c, h, w = x_nchw.shape
    xp = jnp.pad(x_nchw, ((0, 0), (0, 0), (padding, padding), (padding, padding)))
    oh = (h + 2 * padding - kh) // stride + 1
    ow = (w + 2 * padding - kw) // stride + 1
    shifts = [xp[:, :, i:i + stride * oh:stride, j:j + stride * ow:stride]
              for i in range(kh) for j in range(kw)]
    p = jnp.stack(shifts, axis=0)              # (KH*KW, N, C, OH, OW)
    p = jnp.transpose(p, (2, 0, 1, 3, 4))      # (C, KH*KW, N, OH, OW): lane dim untouched
    return p.reshape(c * kh * kw, n * oh * ow), oh, ow


def _vmem_budget_bytes():
    try:
        cap = int(pltpu.get_tpu_info().vmem_capacity_bytes)
    except Exception:
        cap = 64 << 20                         # conservative (v7x per-TC) fallback
    return cap, (cap * 5) // 8                 # ~40 MiB on v7x, ~80 MiB on v5e/v6e


@functools.partial(jax.jit, static_argnames=("stride", "padding", "tm"))
def conv_block_forward(x, conv_w, conv_b, gamma, beta, *, stride, padding, tm=8192):
    # conv_b is accepted for parity with nn.Conv2d but is mathematically inert:
    # a channel-constant bias cancels exactly under training-mode BatchNorm.
    del conv_b
    n, c_in, h, w = x.shape
    c_out, _, kh, kw = conv_w.shape

    patches, oh, ow = _im2col_km(x, kh, kw, stride, padding)   # (K, M)
    k_dim, m = patches.shape

    c8 = _round_up(c_out, SUBLANE)      # output channels -> sublanes (no 128-lane pad)
    kp8 = _round_up(k_dim, SUBLANE)     # contraction dim -> multiple of 8

    cap, budget = _vmem_budget_bytes()

    def vmem_est(t):
        # double-buffered patch tile + double-buffered out tile + weights + small operands
        return 4 * (2 * kp8 * t + 2 * c8 * t + 2 * kp8 * c8) + (1 << 20)

    # Row tile: as large as possible (amortizes ~0.35 us/step), capped by M and
    # by the generation-aware VMEM budget.
    tm_eff = _round_up(min(tm, _round_up(m, LANE)), LANE)
    while tm_eff > LANE and vmem_est(tm_eff) > budget:
        tm_eff = _round_up(tm_eff // 2, LANE)

    n_tiles = (m + tm_eff - 1) // tm_eff
    m_pad = n_tiles * tm_eff

    patches = jnp.pad(patches, ((0, kp8 - k_dim), (0, m_pad - m)))
    # (C_out, C_in, KH, KW) -> (C_out, C_in*KH*KW): K order (c, i, j) matches patches.
    w2d = jnp.pad(conv_w.reshape(c_out, k_dim), ((0, c8 - c_out), (0, kp8 - k_dim)))
    gamma_p = jnp.pad(gamma, (0, c8 - c_out)).reshape(c8, 1)
    beta_p = jnp.pad(beta, (0, c8 - c_out)).reshape(c8, 1)

    vmem_limit = min(cap - (4 << 20), max(budget, vmem_est(tm_eff) + (4 << 20)))
    vmem_limit = int(max(vmem_limit, 16 << 20))

    y = pl.pallas_call(
        functools.partial(_conv_bn_fused_kernel, m_true=m, eps=EPS),
        out_shape=jax.ShapeDtypeStruct((c8, m_pad), jnp.float32),
        grid_spec=pltpu.PrefetchScalarGridSpec(
            num_scalar_prefetch=0,
            grid=(2, n_tiles),                                   # (phase, row tile)
            in_specs=[
                pl.BlockSpec((kp8, tm_eff), lambda ph, i: (0, i)),   # patches (K, M)
                pl.BlockSpec((c8, kp8), lambda ph, i: (0, 0)),       # weights
                pl.BlockSpec((c8, 1), lambda ph, i: (0, 0)),         # gamma
                pl.BlockSpec((c8, 1), lambda ph, i: (0, 0)),         # beta
            ],
            # Phase 0 never writes: keep block 0 resident (index constant) so the
            # only HBM writes are the phase-1 tiles, each flushed exactly once.
            out_specs=pl.BlockSpec((c8, tm_eff), lambda ph, i: (0, i * ph)),
            scratch_shapes=[pltpu.VMEM((c8, 1), jnp.float32)] * 4,  # psum, psq, scale, shift
        ),
        compiler_params=pltpu.CompilerParams(
            dimension_semantics=("arbitrary", "arbitrary"),
            vmem_limit_bytes=vmem_limit),
    )(patches, w2d, gamma_p, beta_p)

    # (c_out, M) -> (N, C_out, OH, OW): only leading axes permute (lane dim fixed).
    out = y[:c_out, :m].reshape(c_out, n, oh, ow)
    return jnp.transpose(out, (1, 0, 2, 3))


# ---------------------------------------------------------------------------
# Reference (pure JAX) for a sanity check
# ---------------------------------------------------------------------------
def _reference(x, conv_w, conv_b, gamma, beta, *, stride, padding):
    y = jax.lax.conv_general_dilated(
        x, conv_w, (stride, stride), [(padding, padding)] * 2,
        dimension_numbers=("NCHW", "OIHW", "NCHW"),
    ) + conv_b.reshape(1, -1, 1, 1)
    mean = y.mean(axis=(0, 2, 3), keepdims=True)
    var = ((y - mean) ** 2).mean(axis=(0, 2, 3), keepdims=True)  # biased (train-mode BN)
    return (y - mean) / jnp.sqrt(var + EPS) * gamma.reshape(1, -1, 1, 1) \
        + beta.reshape(1, -1, 1, 1)


if __name__ == "__main__":
    # Module config: ConvBlock(in_channels=4, out_channels=8, kernel_size=3,
    #                          stride=1, padding=1)
    in_channels, out_channels, kernel_size, stride, padding = 4, 8, 3, 1, 1
    N, H, W = 2, 16, 16

    key = jax.random.PRNGKey(0)
    kx, kw, kb = jax.random.split(key, 3)

    x = jax.random.normal(kx, (N, in_channels, H, W), dtype=jnp.float32)

    # Deterministic parameter init mirroring nn.Conv2d / nn.BatchNorm2d defaults.
    fan_in = in_channels * kernel_size * kernel_size
    bound = 1.0 / (fan_in ** 0.5)
    conv_w = jax.random.uniform(
        kw, (out_channels, in_channels, kernel_size, kernel_size),
        minval=-bound, maxval=bound, dtype=jnp.float32)
    conv_b = jax.random.uniform(
        kb, (out_channels,), minval=-bound, maxval=bound, dtype=jnp.float32)
    gamma = jnp.ones((out_channels,), dtype=jnp.float32)   # BN weight init
    beta = jnp.zeros((out_channels,), dtype=jnp.float32)   # BN bias init

    out = conv_block_forward(x, conv_w, conv_b, gamma, beta,
                             stride=stride, padding=padding)
    out = jax.block_until_ready(out)

    ref = _reference(x, conv_w, conv_b, gamma, beta, stride=stride, padding=padding)
    assert out.shape == (N, out_channels, H, W), out.shape
    assert jnp.allclose(out, ref, rtol=1e-3, atol=1e-3), \
        float(jnp.max(jnp.abs(out - ref)))

    print("KERNEL_OK")
</pallas_src>

<mosaic_0001>
module attributes {stable_mosaic.version = 11 : i64} {
  func.func @_conv_bn_fused_kernel(%arg0: i32, %arg1: i32, %arg2: memref<40x512xf32, #tpu.memory_space<vmem>>, %arg3: memref<8x40xf32, #tpu.memory_space<vmem>>, %arg4: memref<8x1xf32, #tpu.memory_space<vmem>>, %arg5: memref<8x1xf32, #tpu.memory_space<vmem>>, %arg6: memref<8x512xf32, #tpu.memory_space<vmem>>, %arg7: memref<8x1xf32, #tpu.memory_space<vmem>>, %arg8: memref<8x1xf32, #tpu.memory_space<vmem>>, %arg9: memref<8x1xf32, #tpu.memory_space<vmem>>, %arg10: memref<8x1xf32, #tpu.memory_space<vmem>>) attributes {dimension_semantics = [#tpu.dimension_semantics<arbitrary>, #tpu.dimension_semantics<arbitrary>], iteration_bounds = array<i64: 2, 1>, scalar_prefetch = 0 : i64, scratch_operands = 4 : i64, tpu.core_type = #tpu.core_type<tc>, window_params = [{transform_indices = @transform_0, window_bounds = array<i64: 40, 512>}, {pipeline_mode = #tpu.pipeline_mode<synchronous>, transform_indices = @transform_1, window_bounds = array<i64: 8, 40>}, {pipeline_mode = #tpu.pipeline_mode<synchronous>, transform_indices = @transform_2, window_bounds = array<i64: 8, 1>}, {pipeline_mode = #tpu.pipeline_mode<synchronous>, transform_indices = @transform_3, window_bounds = array<i64: 8, 1>}, {transform_indices = @transform_4, window_bounds = array<i64: 8, 512>}]} {
    %c0_i32 = arith.constant 0 : i32
    %0 = arith.cmpi eq, %arg0, %c0_i32 : i32
    %c0_i32_0 = arith.constant 0 : i32
    %1 = arith.cmpi eq, %arg1, %c0_i32_0 : i32
    %2 = arith.andi %0, %1 : i1
    %3 = arith.extui %2 : i1 to i32
    %c0_i32_1 = arith.constant 0 : i32
    %4 = arith.cmpi ne, %3, %c0_i32_1 : i32
    scf.if %4 {
      %cst_11 = arith.constant 0.000000e+00 : f32
      %19 = vector.broadcast %cst_11 : f32 to vector<8x1xf32>
      %c0_12 = arith.constant 0 : index
      %c0_13 = arith.constant 0 : index
      %20 = vector.load %arg7[%c0_12, %c0_13] : memref<8x1xf32, #tpu.memory_space<vmem>>, vector<8x1xf32>
      tpu.vector_store %arg7[%c0_12, %c0_13], %19 {strides = array<i32>} : memref<8x1xf32, #tpu.memory_space<vmem>>, vector<8x1xf32>,
      %cst_14 = arith.constant 0.000000e+00 : f32
      %21 = vector.broadcast %cst_14 : f32 to vector<8x1xf32>
      %c0_15 = arith.constant 0 : index
      %c0_16 = arith.constant 0 : index
      %22 = vector.load %arg8[%c0_15, %c0_16] : memref<8x1xf32, #tpu.memory_space<vmem>>, vector<8x1xf32>
      tpu.vector_store %arg8[%c0_15, %c0_16], %21 {strides = array<i32>} : memref<8x1xf32, #tpu.memory_space<vmem>>, vector<8x1xf32>,
    } else {
    }
    %c0 = arith.constant 0 : index
    %c0_2 = arith.constant 0 : index
    %5 = vector.load %arg3[%c0, %c0_2] : memref<8x40xf32, #tpu.memory_space<vmem>>, vector<8x40xf32>
    %c0_3 = arith.constant 0 : index
    %c0_4 = arith.constant 0 : index
    %6 = vector.load %arg2[%c0_3, %c0_4] : memref<40x512xf32, #tpu.memory_space<vmem>>, vector<40x512xf32>
    %cst = arith.constant dense<0.000000e+00> : vector<8x512xf32>
    %7 = tpu.matmul %5, %6, %cst {dimension_numbers = #tpu.dot_dimension_numbers<[1], [0], [0], [1], [0, 0, 1, 1], [], []>} : vector<8x40xf32>, vector<40x512xf32>, vector<8x512xf32> -> vector<8x512xf32>
    %c0_i32_5 = arith.constant 0 : i32
    %8 = arith.cmpi eq, %arg0, %c0_i32_5 : i32
    %9 = arith.extui %8 : i1 to i32
    %c0_i32_6 = arith.constant 0 : i32
    %10 = arith.cmpi ne, %9, %c0_i32_6 : i32
    scf.if %10 {
      %c0_11 = arith.constant 0 : index
      %c0_12 = arith.constant 0 : index
      %19 = vector.load %arg7[%c0_11, %c0_12] : memref<8x1xf32, #tpu.memory_space<vmem>>, vector<8x1xf32>
      %cst_13 = arith.constant dense<0.000000e+00> : vector<8xf32>
      %20 = vector.multi_reduction <add>, %7, %cst_13 [1] : vector<8x512xf32> to vector<8xf32>
      %21 = vector.shape_cast %20 : vector<8xf32> to vector<8x1xf32>
      %22 = arith.addf %19, %21 : vector<8x1xf32>
      %c0_14 = arith.constant 0 : index
      %c0_15 = arith.constant 0 : index
      %23 = vector.load %arg7[%c0_14, %c0_15] : memref<8x1xf32, #tpu.memory_space<vmem>>, vector<8x1xf32>
      tpu.vector_store %arg7[%c0_14, %c0_15], %22 {strides = array<i32>} : memref<8x1xf32, #tpu.memory_space<vmem>>, vector<8x1xf32>,
      %c0_16 = arith.constant 0 : index
      %c0_17 = arith.constant 0 : index
      %24 = vector.load %arg8[%c0_16, %c0_17] : memref<8x1xf32, #tpu.memory_space<vmem>>, vector<8x1xf32>
      %25 = arith.mulf %7, %7 : vector<8x512xf32>
      %cst_18 = arith.constant dense<0.000000e+00> : vector<8xf32>
      %26 = vector.multi_reduction <add>, %25, %cst_18 [1] : vector<8x512xf32> to vector<8xf32>
      %27 = vector.shape_cast %26 : vector<8xf32> to vector<8x1xf32>
      %28 = arith.addf %24, %27 : vector<8x1xf32>
      %c0_19 = arith.constant 0 : index
      %c0_20 = arith.constant 0 : index
      %29 = vector.load %arg8[%c0_19, %c0_20] : memref<8x1xf32, #tpu.memory_space<vmem>>, vector<8x1xf32>
      tpu.vector_store %arg8[%c0_19, %c0_20], %28 {strides = array<i32>} : memref<8x1xf32, #tpu.memory_space<vmem>>, vector<8x1xf32>,
    } else {
    }
    %c1_i32 = arith.constant 1 : i32
    %11 = arith.cmpi eq, %arg0, %c1_i32 : i32
    %c0_i32_7 = arith.constant 0 : i32
    %12 = arith.cmpi eq, %arg1, %c0_i32_7 : i32
    %13 = arith.andi %11, %12 : i1
    %14 = arith.extui %13 : i1 to i32
    %c0_i32_8 = arith.constant 0 : i32
    %15 = arith.cmpi ne, %14, %c0_i32_8 : i32
    scf.if %15 {
      %c0_11 = arith.constant 0 : index
      %c0_12 = arith.constant 0 : index
      %19 = vector.load %arg7[%c0_11, %c0_12] : memref<8x1xf32, #tpu.memory_space<vmem>>, vector<8x1xf32>
      %cst_13 = arith.constant 0.001953125 : f32
      %20 = vector.broadcast %cst_13 : f32 to vector<8x1xf32>
      %21 = arith.mulf %19, %20 : vector<8x1xf32>
      %c0_14 = arith.constant 0 : index
      %c0_15 = arith.constant 0 : index
      %22 = vector.load %arg8[%c0_14, %c0_15] : memref<8x1xf32, #tpu.memory_space<vmem>>, vector<8x1xf32>
      %cst_16 = arith.constant 0.001953125 : f32
      %23 = vector.broadcast %cst_16 : f32 to vector<8x1xf32>
      %24 = arith.mulf %22, %23 : vector<8x1xf32>
      %25 = arith.mulf %21, %21 : vector<8x1xf32>
      %26 = arith.subf %24, %25 : vector<8x1xf32>
      %cst_17 = arith.constant 0.000000e+00 : f32
      %27 = vector.broadcast %cst_17 : f32 to vector<8x1xf32>
      %28 = arith.maximumf %26, %27 : vector<8x1xf32>
      %c0_18 = arith.constant 0 : index
      %c0_19 = arith.constant 0 : index
      %29 = vector.load %arg4[%c0_18, %c0_19] : memref<8x1xf32, #tpu.memory_space<vmem>>, vector<8x1xf32>
      %cst_20 = arith.constant 9.99999974E-6 : f32
      %30 = vector.broadcast %cst_20 : f32 to vector<8x1xf32>
      %31 = arith.addf %28, %30 : vector<8x1xf32>
      %32 = math.rsqrt %31 : vector<8x1xf32>
      %33 = arith.mulf %29, %32 : vector<8x1xf32>
      %c0_21 = arith.constant 0 : index
      %c0_22 = arith.constant 0 : index
      %34 = vector.load %arg9[%c0_21, %c0_22] : memref<8x1xf32, #tpu.memory_space<vmem>>, vector<8x1xf32>
      tpu.vector_store %arg9[%c0_21, %c0_22], %33 {strides = array<i32>} : memref<8x1xf32, #tpu.memory_space<vmem>>, vector<8x1xf32>,
      %c0_23 = arith.constant 0 : index
      %c0_24 = arith.constant 0 : index
      %35 = vector.load %arg5[%c0_23, %c0_24] : memref<8x1xf32, #tpu.memory_space<vmem>>, vector<8x1xf32>
      %36 = arith.mulf %21, %33 : vector<8x1xf32>
      %37 = arith.subf %35, %36 : vector<8x1xf32>
      %c0_25 = arith.constant 0 : index
      %c0_26 = arith.constant 0 : index
      %38 = vector.load %arg10[%c0_25, %c0_26] : memref<8x1xf32, #tpu.memory_space<vmem>>, vector<8x1xf32>
      tpu.vector_store %arg10[%c0_25, %c0_26], %37 {strides = array<i32>} : memref<8x1xf32, #tpu.memory_space<vmem>>, vector<8x1xf32>,
    } else {
    }
    %c1_i32_9 = arith.constant 1 : i32
    %16 = arith.cmpi eq, %arg0, %c1_i32_9 : i32
    %17 = arith.extui %16 : i1 to i32
    %c0_i32_10 = arith.constant 0 : i32
    %18 = arith.cmpi ne, %17, %c0_i32_10 : i32
    scf.if %18 {
      %c0_11 = arith.constant 0 : index
      %c0_12 = arith.constant 0 : index
      %19 = vector.load %arg9[%c0_11, %c0_12] : memref<8x1xf32, #tpu.memory_space<vmem>>, vector<8x1xf32>
      %20 = vector.broadcast %19 : vector<8x1xf32> to vector<8x512xf32>
      %21 = arith.mulf %7, %20 : vector<8x512xf32>
      %c0_13 = arith.constant 0 : index
      %c0_14 = arith.constant 0 : index
      %22 = vector.load %arg10[%c0_13, %c0_14] : memref<8x1xf32, #tpu.memory_space<vmem>>, vector<8x1xf32>
      %23 = vector.broadcast %22 : vector<8x1xf32> to vector<8x512xf32>
      %24 = arith.addf %21, %23 : vector<8x512xf32>
      %c0_15 = arith.constant 0 : index
      %c0_16 = arith.constant 0 : index
      %25 = vector.load %arg6[%c0_15, %c0_16] : memref<8x512xf32, #tpu.memory_space<vmem>>, vector<8x512xf32>
      tpu.vector_store %arg6[%c0_15, %c0_16], %24 {strides = array<i32>} : memref<8x512xf32, #tpu.memory_space<vmem>>, vector<8x512xf32>,
    } else {
    }
    return
  }
  func.func @transform_0(%arg0: i32, %arg1: i32) -> (i32, i32) {
    %c0_i32 = arith.constant 0 : i32
    %c0_i32_0 = arith.constant 0 : i32
    return %c0_i32, %arg1 : i32, i32
  }
  func.func @transform_1(%arg0: i32, %arg1: i32) -> (i32, i32) {
    %c0_i32 = arith.constant 0 : i32
    %c0_i32_0 = arith.constant 0 : i32
    %c0_i32_1 = arith.constant 0 : i32
    return %c0_i32, %c0_i32_0 : i32, i32
  }
  func.func @transform_2(%arg0: i32, %arg1: i32) -> (i32, i32) {
    %c0_i32 = arith.constant 0 : i32
    %c0_i32_0 = arith.constant 0 : i32
    %c0_i32_1 = arith.constant 0 : i32
    return %c0_i32, %c0_i32_0 : i32, i32
  }
  func.func @transform_3(%arg0: i32, %arg1: i32) -> (i32, i32) {
    %c0_i32 = arith.constant 0 : i32
    %c0_i32_0 = arith.constant 0 : i32
    %c0_i32_1 = arith.constant 0 : i32
    return %c0_i32, %c0_i32_0 : i32, i32
  }
  func.func @transform_4(%arg0: i32, %arg1: i32) -> (i32, i32) {
    %0 = arith.muli %arg1, %arg0 : i32
    %c0_i32 = arith.constant 0 : i32
    %c0_i32_0 = arith.constant 0 : i32
    return %c0_i32, %0 : i32, i32
  }
}

</mosaic_0001>

<llo_original>
// kernel: conv_block_forward.1
$region0: #{conv_block_forward.1}
  #allocation0 [shape = 'u32[]', space=smem, size = 0x4, offset = 0x4, fixed_abs, tag = 'smem constant byte address 0x4 - core index']
  #allocation1 [shape = 'u32[144,128]{1,0:T(1,128)}', space=vmem, size = 0x12000, scoped, tag = 'internal scratch']
  #allocation2 [shape = 'f32[8,1]{1,0:T(8,128)}', space=vmem, size = 0x1000, scoped, tag = 'scratch operand']
  #allocation3 [shape = 'f32[8,1]{1,0:T(8,128)}', space=vmem, size = 0x1000, scoped, tag = 'scratch operand']
  #allocation4 [shape = 'f32[8,1]{1,0:T(8,128)}', space=vmem, size = 0x1000, scoped, tag = 'scratch operand']
  #allocation5 [shape = 'f32[8,1]{1,0:T(8,128)}', space=vmem, size = 0x1000, scoped, tag = 'scratch operand']
  %s0 = inlined_call_operand.vmem [shape: f32[40,512], index: 0, kind: input, shape index: {}]
  %s1 = inlined_call_operand.vmem [shape: f32[8,40], index: 1, kind: input, shape index: {}]
  %s2 = inlined_call_operand.vmem [shape: f32[8,1], index: 2, kind: input, shape index: {}]
  %s3 = inlined_call_operand.vmem [shape: f32[8,1], index: 3, kind: input, shape index: {}]
  %s4 = inlined_call_operand.vmem [shape: f32[8,512], index: 4, kind: output, shape index: {}]
  %s5 = sld [smem:[#allocation0]]
  $region65: #{conv_block_forward.1} parent=0
    _
  %s7 = ssub.s32 1, %s5
  %s8 = scalar_select 0, %s7, %s5
  loop: start=0, step=1, limit=4
  $region2: #{conv_block_forward.1} parent=0 // loop_pre_header
    _
  $region3: #{conv_block_forward.1} parent=0 // loop_header
    %s10 = sphi 0, %s14
    %p11 = scmp.ge.s32.totalorder %s10, 4
    %s17 = sphi 0, %s29
    %s18 = sphi 0, %s25
    %s19 = sphi 0, %s17
    %s20 = sphi 0, %s18
    %s21 = sphi 0, %s19
    %s22 = sphi 0, %s20
    %s32 = sphi 0, %s34
    %s35 = sphi 0, %s32
    %s36 = sphi 0, %s35
    %s52 = sphi 0, %s36
    %s56 = sphi 0, %s56
    %s58 = sphi 0, %s56
    %s59 = sphi 0, %s58
    %s73 = sphi 0, %s59
    %s77 = sphi 0, %s77
    %s79 = sphi 0, %s77
    %s80 = sphi 0, %s79
    %s94 = sphi 0, %s80
    %s98 = sphi 0, %s98
    %s100 = sphi 0, %s98
    %s101 = sphi 0, %s100
    %s115 = sphi 0, %s101
    %s123 = sphi 0, %s125
    %s126 = sphi 0, %s123
    %s127 = sphi 0, %s126
    %s143 = sphi 0, %s127
  $region4: #{conv_block_forward.1} parent=0 // loop_header_branch
    %13 = sbr.rel (%p11) target = $region8
  $region5: #{conv_block_forward.1} parent=0 // loop_body
    %s15 = ssub.s32 %s10, 1
    %s16 = ssub.s32 %s10, 2
    %s23 = sadd.s32 1, %s18
    %p24 = scmp.ge.s32.totalorder %s23, 1
    %s25 = scalar_select %p24, 0, %s23
    %s26 = sadd.s32 1, %s17
    %s27 = scalar_select %p24, %s26, %s17
    %p28 = scmp.ge.s32.totalorder %s27, 2
    %s29 = scalar_select %p28, 0, %s27
    %s30 = ssub.s32 %s18, %s25
    %p31 = scmp.eq.s32.totalorder %s30, 0
    %s33 = sadd.s32 %s32, 1
    %s34 = scalar_select %p31, %s32, %s33
    %p37 = pneg %p31
    %p38 = scmp.eq.s32.totalorder %s10, 1
    %p39 = por %p37, %p38
    %p40 = scmp.ne.s32.totalorder %s32, %s35
    %p41 = scmp.eq.s32.totalorder %s10, 0
    %p42 = por %p40, %p41
    %p43 = scmp.ne.s32.totalorder %s32, %s35
    %p44 = scmp.eq.s32.totalorder %s15, 1
    %p45 = por %p43, %p44
    %p46 = scmp.ne.s32.totalorder %s35, %s36
    %p47 = scmp.eq.s32.totalorder %s15, 0
    %p48 = por %p46, %p47
    %p49 = scmp.ne.s32.totalorder %s35, %s36
    %p50 = scmp.eq.s32.totalorder %s16, 1
    %p51 = por %p49, %p50
    %p53 = scmp.ne.s32.totalorder %s36, %s52
    %p54 = scmp.eq.s32.totalorder %s16, 0
    %p55 = por %p53, %p54
    %s57 = sadd.s32 %s56, 1
    %p60 = scmp.eq.s32.totalorder %s10, 1
    %p61 = scmp.ne.s32.totalorder %s56, %s58
    %p62 = scmp.eq.s32.totalorder %s10, 0
    %p63 = por %p61, %p62
    %p64 = scmp.ne.s32.totalorder %s56, %s58
    %p65 = scmp.eq.s32.totalorder %s15, 1
    %p66 = por %p64, %p65
    %p67 = scmp.ne.s32.totalorder %s58, %s59
    %p68 = scmp.eq.s32.totalorder %s15, 0
    %p69 = por %p67, %p68
    %p70 = scmp.ne.s32.totalorder %s58, %s59
    %p71 = scmp.eq.s32.totalorder %s16, 1
    %p72 = por %p70, %p71
    %p74 = scmp.ne.s32.totalorder %s59, %s73
    %p75 = scmp.eq.s32.totalorder %s16, 0
    %p76 = por %p74, %p75
    %s78 = sadd.s32 %s77, 1
    %p81 = scmp.eq.s32.totalorder %s10, 1
    %p82 = scmp.ne.s32.totalorder %s77, %s79
    %p83 = scmp.eq.s32.totalorder %s10, 0
    %p84 = por %p82, %p83
    %p85 = scmp.ne.s32.totalorder %s77, %s79
    %p86 = scmp.eq.s32.totalorder %s15, 1
    %p87 = por %p85, %p86
    %p88 = scmp.ne.s32.totalorder %s79, %s80
    %p89 = scmp.eq.s32.totalorder %s15, 0
    %p90 = por %p88, %p89
    %p91 = scmp.ne.s32.totalorder %s79, %s80
    %p92 = scmp.eq.s32.totalorder %s16, 1
    %p93 = por %p91, %p92
    %p95 = scmp.ne.s32.totalorder %s80, %s94
    %p96 = scmp.eq.s32.totalorder %s16, 0
    %p97 = por %p95, %p96
    %s99 = sadd.s32 %s98, 1
    %p102 = scmp.eq.s32.totalorder %s10, 1
    %p103 = scmp.ne.s32.totalorder %s98, %s100
    %p104 = scmp.eq.s32.totalorder %s10, 0
    %p105 = por %p103, %p104
    %p106 = scmp.ne.s32.totalorder %s98, %s100
    %p107 = scmp.eq.s32.totalorder %s15, 1
    %p108 = por %p106, %p107
    %p109 = scmp.ne.s32.totalorder %s100, %s101
    %p110 = scmp.eq.s32.totalorder %s15, 0
    %p111 = por %p109, %p110
    %p112 = scmp.ne.s32.totalorder %s100, %s101
    %p113 = scmp.eq.s32.totalorder %s16, 1
    %p114 = por %p112, %p113
    %p116 = scmp.ne.s32.totalorder %s101, %s115
    %p117 = scmp.eq.s32.totalorder %s16, 0
    %p118 = por %p116, %p117
    %s119 = smul.u32 %s18, %s17
    %s120 = smul.u32 %s25, %s29
    %s121 = ssub.s32 %s119, %s120
    %p122 = scmp.eq.s32.totalorder %s121, 0
    %s124 = sadd.s32 %s123, 1
    %s125 = scalar_select %p122, %s123, %s124
    %p128 = pneg %p122
    %p129 = scmp.eq.s32.totalorder %s10, 1
    %p130 = por %p128, %p129
    %p131 = scmp.ne.s32.totalorder %s123, %s126
    %p132 = scmp.eq.s32.totalorder %s10, 0
    %p133 = por %p131, %p132
    %p134 = scmp.ne.s32.totalorder %s123, %s126
    %p135 = scmp.eq.s32.totalorder %s15, 1
    %p136 = por %p134, %p135
    %p137 = scmp.ne.s32.totalorder %s126, %s127
    %p138 = scmp.eq.s32.totalorder %s15, 0
    %p139 = por %p137, %p138
    %p140 = scmp.ne.s32.totalorder %s126, %s127
    %p141 = scmp.eq.s32.totalorder %s16, 1
    %p142 = por %p140, %p141
    %p144 = scmp.ne.s32.totalorder %s127, %s143
    %p145 = scmp.eq.s32.totalorder %s16, 0
    %p146 = por %p144, %p145
    %p147 = scmp.le.s32.totalorder 1, %s10
    %p148 = scmp.lt.s32.totalorder %s10, 3
    %p149 = pnand %p147, %p148
    %p150 = pneg %p149
    // Predicated region
    $region9: #{conv_block_forward.1} parent=5 // pred_check
      _
    $region10: #{conv_block_forward.1} parent=5 // pred_check_branch
      %152 = sbr.rel (%p149) target = $region12
    $region11: #{conv_block_forward.1} parent=5 // pred_region
      %s153 = ssub.s32 %s10, 1
      // Predicated region
      $region13: #{conv_block_forward.1} parent=11 // pred_check
        %p154 = pneg %p48
      $region14: #{conv_block_forward.1} parent=11 // pred_check_branch
        %156 = sbr.rel (%p154) target = $region16
      $region15: #{conv_block_forward.1} parent=11 // pred_region
        %s157 = smul.u32 4, %s20
        %p158 = scmp.lt.s32.totalorder %s157, 3
        %s159 = scalar_select %p158, %s157, 3
        %s160 = smul.addr %s159, 8
        %s161 = scalar_lea.vmem %s0, %s160
        %s162 = smul.u32 4, %s20
      $region16: #{conv_block_forward.1} parent=11 // pred_fallthru
        _
      // Predicated region
      $region17: #{conv_block_forward.1} parent=11 // pred_check
        %p163 = pneg %p69
      $region18: #{conv_block_forward.1} parent=11 // pred_check_branch
        %165 = sbr.rel (%p163) target = $region20
      $region19: #{conv_block_forward.1} parent=11 // pred_region
        _
      $region20: #{conv_block_forward.1} parent=11 // pred_fallthru
        _
      // Predicated region
      $region21: #{conv_block_forward.1} parent=11 // pred_check
        %p166 = pneg %p90
      $region22: #{conv_block_forward.1} parent=11 // pred_check_branch
        %168 = sbr.rel (%p166) target = $region24
      $region23: #{conv_block_forward.1} parent=11 // pred_region
        _
      $region24: #{conv_block_forward.1} parent=11 // pred_fallthru
        _
      // Predicated region
      $region25: #{conv_block_forward.1} parent=11 // pred_check
        %p169 = pneg %p111
      $region26: #{conv_block_forward.1} parent=11 // pred_check_branch
        %171 = sbr.rel (%p169) target = $region28
      $region27: #{conv_block_forward.1} parent=11 // pred_region
        _
      $region28: #{conv_block_forward.1} parent=11 // pred_fallthru
        _
    $region12: #{conv_block_forward.1} parent=5 // pred_fallthru
      _
    %p172 = scmp.lt.s32.totalorder %s10, 2
    // Predicated region
    $region29: #{conv_block_forward.1} parent=5 // pred_check
      %p173 = pneg %p172
    $region30: #{conv_block_forward.1} parent=5 // pred_check_branch
      %175 = sbr.rel (%p173) target = $region32
    $region31: #{conv_block_forward.1} parent=5 // pred_region
      _
    $region32: #{conv_block_forward.1} parent=5 // pred_fallthru
      _
    %p176 = scmp.le.s32.totalorder 1, %s10
    %p177 = scmp.lt.s32.totalorder %s10, 3
    %p178 = pnand %p176, %p177
    %p179 = pneg %p178
    // Predicated region
    $region33: #{conv_block_forward.1} parent=5 // pred_check
      _
    $region34: #{conv_block_forward.1} parent=5 // pred_check_branch
      %181 = sbr.rel (%p178) target = $region36
    $region35: #{conv_block_forward.1} parent=5 // pred_region
      %s182 = ssub.s32 %s10, 1
      %s183 = smul.u32 4, %s20
      %p184 = scmp.lt.s32.totalorder %s183, 3
      %s185 = scalar_select %p184, %s183, 3
      %s186 = smul.addr %s185, 8
      %s187 = scalar_lea.vmem %s0, %s186
      %p188 = pneg %p48
      %p189 = pneg %p45
      %p190 = pneg %p69
      %p191 = pneg %p66
      %p192 = pneg %p90
      %p193 = pneg %p87
      %p194 = pneg %p111
      %p195 = pneg %p108
      %p196 = pneg %p139
      %p197 = pneg %p136
      %s198 = smul.u32 %s20, %s19
      %s199 = smul.u32 4, %s198
      %p200 = scmp.lt.s32.totalorder %s199, 3
      %s201 = scalar_select %p200, %s199, 3
      %s202 = smul.addr %s201, 8
      %s203 = scalar_lea.vmem %s4, %s202
      %s204 = smul.u32 4, %s20
      %p205 = scmp.lt.s32.totalorder %s204, 3
      %s206 = scalar_select %p205, %s204, 3
      %s207 = smul.addr %s206, 8
      %s208 = scalar_lea.vmem %s0, %s207
      %s209 = smul.u32 4, %s20
      %s210 = smul.u32 %s20, %s19
      %s211 = smul.u32 4, %s210
      %p212 = scmp.lt.s32.totalorder %s211, 3
      %s213 = scalar_select %p212, %s211, 3
      %s214 = smul.addr %s213, 8
      %s215 = scalar_lea.vmem %s4, %s214
      %s216 = smul.u32 %s20, %s19
      %s217 = smul.u32 4, %s216
      %p218 = scmp.eq.s32.totalorder %s19, 0
      %p219 = scmp.eq.s32.totalorder %s20, 0
      %p220 = pnand %p218, %p219
      %p221 = pneg %p220
      // Predicated region
      $region37: #{conv_block_forward.1} parent=35 // pred_check
        _
      $region38: #{conv_block_forward.1} parent=35 // pred_check_branch
        %223 = sbr.rel (%p220) target = $region40
      $region39: #{conv_block_forward.1} parent=35 // pred_region
        %vm224 = vcmask 7168
        %225 = vst.msk [vmem:[#allocation2] sm:$0xff] %vm224, 0.0
        %226 = vst.msk [vmem:[#allocation3] sm:$0xff] %vm224, 0.0
      $region40: #{conv_block_forward.1} parent=35 // pred_fallthru
        _
      %v227 = vld [vmem:[%s1] sm:$0xff]
      %v228 = vld [vmem:[%s208] sm:$0xff]
      %v229 = vld [vmem:[%s208 + $0x8] sm:$0xff]
      %v230 = vld [vmem:[%s208 + $0x10] sm:$0xff]
      %v231 = vld [vmem:[%s208 + $0x18] sm:$0xff]
      %v232 = vld [vmem:[%s208 + $0x20] sm:$0xff]
      %v233 = vld [vmem:[%s208 + $0x28] sm:$0xff]
      %v234 = vld [vmem:[%s208 + $0x30] sm:$0xff]
      %v235 = vld [vmem:[%s208 + $0x38] sm:$0xff]
      %v236 = vld [vmem:[%s208 + $0x40] sm:$0xff]
      %v237 = vld [vmem:[%s208 + $0x48] sm:$0xff]
      %v238 = vld [vmem:[%s208 + $0x50] sm:$0xff]
      %v239 = vld [vmem:[%s208 + $0x58] sm:$0xff]
      %v240 = vld [vmem:[%s208 + $0x60] sm:$0xff]
      %v241 = vld [vmem:[%s208 + $0x68] sm:$0xff]
      %v242 = vld [vmem:[%s208 + $0x70] sm:$0xff]
      %v243 = vld [vmem:[%s208 + $0x78] sm:$0xff]
      %v244 = vld [vmem:[%s208 + $0x80] sm:$0xff]
      %v245 = vld [vmem:[%s208 + $0x88] sm:$0xff]
      %v246 = vld [vmem:[%s208 + $0x90] sm:$0xff]
      %v247 = vld [vmem:[%s208 + $0x98] sm:$0xff]
      %vm248 = vcmask 326656
      %v250 = vsel %vm248, %v227, 0
      %252 = vmatprep.subr.mxu0 %v229
      %253 = vmatpush1.msra.mxu0 %v228
      %254 = vmatprep.subr.mxu0 %v233
      %255 = vmatpush1.msra.mxu0 %v232
      %256 = vmatprep.subr.mxu0 %v237
      %257 = vmatpush1.msra.mxu0 %v236
      %258 = vmatprep.subr.mxu0 %v241
      %259 = vmatpush1.msra.mxu0 %v240
      %260 = vmatprep.subr.mxu0 %v245
      %261 = vmatpush1.msra.mxu0 %v244
      %262 = vmatprep.subr.mxu0 0.0
      %263 = vmatpush1.msra.mxu0 0.0
      %264 = vmatprep.subr.mxu0 0.0
      %265 = vmatpush1.msra.mxu0 0.0
      %266 = vmatprep.subr.mxu0 0.0
      %267 = vmatpush1.msra.mxu0 0.0
      %268 = vmatprep.subr.mxu0 0.0
      %269 = vmatpush1.msra.mxu0 0.0
      %270 = vmatprep.subr.mxu0 0.0
      %271 = vmatpush1.msra.mxu0 0.0
      %272 = vmatprep.subr.mxu0 0.0
      %273 = vmatpush1.msra.mxu0 0.0
      %274 = vmatprep.subr.mxu0 0.0
      %275 = vmatpush1.msra.mxu0 0.0
      %276 = vmatprep.subr.mxu0 0.0
      %277 = vmatpush1.msra.mxu0 0.0
      %278 = vmatprep.subr.mxu0 0.0
      %279 = vmatpush1.msra.mxu0 0.0
      %280 = vmatprep.subr.mxu0 0.0
      %281 = vmatpush1.msra.mxu0 0.0
      %282 = vmatprep.subr.mxu0 0.0
      %283 = vmatpush1.msra.mxu0 0.0
      %284 = vmatprep.subr.mxu0 0.0
      %285 = vmatpush1.msra.mxu0 0.0
      %286 = vmatprep.subr.mxu0 0.0
      %287 = vmatpush1.msra.mxu0 0.0
      %288 = vmatprep.subr.mxu0 0.0
      %289 = vmatpush1.msra.mxu0 0.0
      %290 = vmatprep.subr.mxu0 0.0
      %291 = vmatpush1.msra.mxu0 0.0
      %292 = vmatprep.subr.mxu0 0.0
      %293 = vmatpush1.msra.mxu0 0.0
      %294 = vmatprep.subr.mxu0 0.0
      %295 = vmatpush1.msra.mxu0 0.0
      %296 = vmatprep.subr.mxu0 0.0
      %297 = vmatpush1.msra.mxu0 0.0
      %298 = vmatprep.subr.mxu0 0.0
      %299 = vmatpush1.msra.mxu0 0.0
      %300 = vmatprep.subr.mxu0 0.0
      %301 = vmatpush1.msra.mxu0 0.0
      %302 = vmatprep.subr.mxu0 0.0
      %303 = vmatpush1.msra.mxu0 0.0
      %304 = vmatprep.subr.mxu0 0.0
      %305 = vmatpush1.msra.mxu0 0.0
      %306 = vmatprep.subr.mxu0 0.0
      %307 = vmatpush1.msra.mxu0 0.0
      %308 = vmatprep.subr.mxu0 0.0
      %309 = vmatpush1.msra.mxu0 0.0
      %310 = vmatprep.subr.mxu0 0.0
      %311 = vmatpush1.msra.mxu0 0.0
      %312 = vmatprep.subr.mxu0 0.0
      %313 = vmatpush1.msra.mxu0 0.0
      %314 = vmatprep.subr.mxu0 0.0
      %315 = vmatpush1.msra.mxu0 0.0
      %316 = vmatprep.mubr.f32.mxu0 0.0
      %317 = vmatmul.mubr.f32.gmra.mrb[0].mxu0 %v250
      %v318 = vpop.f32.mrb[0].mxu0
      %v319 = vadd.f32 0.0, %v318
      %v320 = vpop.f32.mrb[0].mxu0
      %v321 = vadd.f32 0.0, %v320
      %322 = vdwg.mxu0
      %323 = vmatprep.subr.mxu0 %v231
      %324 = vmatpush1.msra.mxu0 %v230
      %325 = vmatprep.subr.mxu0 %v235
      %326 = vmatpush1.msra.mxu0 %v234
      %327 = vmatprep.subr.mxu0 %v239
      %328 = vmatpush1.msra.mxu0 %v238
      %329 = vmatprep.subr.mxu0 %v243
      %330 = vmatpush1.msra.mxu0 %v242
      %331 = vmatprep.subr.mxu0 %v247
      %332 = vmatpush1.msra.mxu0 %v246
      %333 = vmatprep.subr.mxu0 0.0
      %334 = vmatpush1.msra.mxu0 0.0
      %335 = vmatprep.subr.mxu0 0.0
      %336 = vmatpush1.msra.mxu0 0.0
      %337 = vmatprep.subr.mxu0 0.0
      %338 = vmatpush1.msra.mxu0 0.0
      %339 = vmatprep.subr.mxu0 0.0
      %340 = vmatpush1.msra.mxu0 0.0
      %341 = vmatprep.subr.mxu0 0.0
      %342 = vmatpush1.msra.mxu0 0.0
      %343 = vmatprep.subr.mxu0 0.0
      %344 = vmatpush1.msra.mxu0 0.0
      %345 = vmatprep.subr.mxu0 0.0
      %346 = vmatpush1.msra.mxu0 0.0
      %347 = vmatprep.subr.mxu0 0.0
      %348 = vmatpush1.msra.mxu0 0.0
      %349 = vmatprep.subr.mxu0 0.0
      %350 = vmatpush1.msra.mxu0 0.0
      %351 = vmatprep.subr.mxu0 0.0
      %352 = vmatpush1.msra.mxu0 0.0
      %353 = vmatprep.subr.mxu0 0.0
      %354 = vmatpush1.msra.mxu0 0.0
      %355 = vmatprep.subr.mxu0 0.0
      %356 = vmatpush1.msra.mxu0 0.0
      %357 = vmatprep.subr.mxu0 0.0
      %358 = vmatpush1.msra.mxu0 0.0
      %359 = vmatprep.subr.mxu0 0.0
      %360 = vmatpush1.msra.mxu0 0.0
      %361 = vmatprep.subr.mxu0 0.0
      %362 = vmatpush1.msra.mxu0 0.0
      %363 = vmatprep.subr.mxu0 0.0
      %364 = vmatpush1.msra.mxu0 0.0
      %365 = vmatprep.subr.mxu0 0.0
      %366 = vmatpush1.msra.mxu0 0.0
      %367 = vmatprep.subr.mxu0 0.0
      %368 = vmatpush1.msra.mxu0 0.0
      %369 = vmatprep.subr.mxu0 0.0
      %370 = vmatpush1.msra.mxu0 0.0
      %371 = vmatprep.subr.mxu0 0.0
      %372 = vmatpush1.msra.mxu0 0.0
      %373 = vmatprep.subr.mxu0 0.0
      %374 = vmatpush1.msra.mxu0 0.0
      %375 = vmatprep.subr.mxu0 0.0
      %376 = vmatpush1.msra.mxu0 0.0
      %377 = vmatprep.subr.mxu0 0.0
      %378 = vmatpush1.msra.mxu0 0.0
      %379 = vmatprep.subr.mxu0 0.0
      %380 = vmatpush1.msra.mxu0 0.0
      %381 = vmatprep.subr.mxu0 0.0
      %382 = vmatpush1.msra.mxu0 0.0
      %383 = vmatprep.subr.mxu0 0.0
      %384 = vmatpush1.msra.mxu0 0.0
      %385 = vmatprep.subr.mxu0 0.0
      %386 = vmatpush1.msra.mxu0 0.0
      %387 = vmatprep.mubr.f32.mxu0 0.0
      %388 = vmatmul.mubr.f32.gmra.mrb[0].mxu0 %v250
      %v389 = vpop.f32.mrb[0].mxu0
      %v390 = vadd.f32 0.0, %v389
      %v391 = vpop.f32.mrb[0].mxu0
      %v392 = vadd.f32 0.0, %v391
      %393 = vdwg.mxu0
      // Predicated region
      $region41: #{conv_block_forward.1} parent=35 // pred_check
        %p394 = pneg %p218
      $region42: #{conv_block_forward.1} parent=35 // pred_check_branch
        %396 = sbr.rel (%p394) target = $region44
      $region43: #{conv_block_forward.1} parent=35 // pred_region
        %v397 = vld [vmem:[#allocation2] sm:$0xff]
        %v398 = vadd.f32 %v319, %v321
        %v399 = vadd.f32 %v398, %v390
        %v400 = vadd.f32 %v399, %v392
        %401 = vadd.xlane.f32.xlu0 %v400
        %v402 = vpop.xlane.xlu0 %401
        %v403 = vadd.f32 %v397, %v402
        %vm404 = vcmask 7168
        %405 = vst.msk [vmem:[#allocation2] sm:$0xff] %vm404, %v403
        %v406 = vld [vmem:[#allocation3] sm:$0xff]
        %v407 = vmul.f32 %v319, %v319
        %v408 = vmul.f32 %v321, %v321
        %v409 = vmul.f32 %v390, %v390
        %v410 = vmul.f32 %v392, %v392
        %v411 = vadd.f32 %v407, %v408
        %v412 = vadd.f32 %v411, %v409
        %v413 = vadd.f32 %v412, %v410
        %414 = vadd.xlane.f32.xlu0 %v413
        %v415 = vpop.xlane.xlu0 %414
        %v416 = vadd.f32 %v406, %v415
        %417 = vst.msk [vmem:[#allocation3] sm:$0xff] %vm404, %v416
      $region44: #{conv_block_forward.1} parent=35 // pred_fallthru
        _
      %p418 = scmp.eq.s32.totalorder %s19, 1
      %p419 = pnand %p418, %p219
      %p420 = pneg %p419
      // Predicated region
      $region45: #{conv_block_forward.1} parent=35 // pred_check
        _
      $region46: #{conv_block_forward.1} parent=35 // pred_check_branch
        %422 = sbr.rel (%p419) target = $region48
      $region47: #{conv_block_forward.1} parent=35 // pred_region
        %v423 = vld [vmem:[#allocation2] sm:$0xff]
        %v424 = vmul.f32 %v423, 0.001953125
        %v425 = vld [vmem:[#allocation3] sm:$0xff]
        %v426 = vmul.f32 %v425, 0.001953125
        %v427 = vmul.f32 %v424, %v424
        %v428 = vsub.f32 %v426, %v427
        %v429 = vmax.f32 %v428, 0.0
        %v430 = vld [vmem:[%s2] sm:$0xff]
        %v431 = vadd.f32 %v429, 1e-05
        %v432 = vrsqrt.pop %v431
        %v433 = vmul.f32 %v430, %v432
        %vm434 = vcmask 7168
        %435 = vst.msk [vmem:[#allocation4] sm:$0xff] %vm434, %v433
        %v436 = vld [vmem:[%s3] sm:$0xff]
        %v437 = vmul.f32 %v424, %v433
        %v438 = vsub.f32 %v436, %v437
        %439 = vst.msk [vmem:[#allocation5] sm:$0xff] %vm434, %v438
      $region48: #{conv_block_forward.1} parent=35 // pred_fallthru
        _
      // Predicated region
      $region49: #{conv_block_forward.1} parent=35 // pred_check
        %p440 = pneg %p418
      $region50: #{conv_block_forward.1} parent=35 // pred_check_branch
        %442 = sbr.rel (%p440) target = $region52
      $region51: #{conv_block_forward.1} parent=35 // pred_region
        %v443 = vld [vmem:[#allocation4] sm:$0xff]
        %445 = vset.pattern.permute.xlu0 0
        %446 = vperm.xlu0 %445, %v443
        %v447 = vpop.permute.xlu0 %446
        %v449 = vmul.f32 %v319, %v447
        %v450 = vmul.f32 %v321, %v447
        %v451 = vmul.f32 %v390, %v447
        %v452 = vmul.f32 %v392, %v447
        %v453 = vld [vmem:[#allocation5] sm:$0xff]
        %455 = vset.pattern.permute.xlu0 0
        %456 = vperm.xlu0 %455, %v453
        %v457 = vpop.permute.xlu0 %456
        %v459 = vadd.f32 %v449, %v457
        %v460 = vadd.f32 %v450, %v457
        %v461 = vadd.f32 %v451, %v457
        %v462 = vadd.f32 %v452, %v457
        %463 = vst [vmem:[%s215] sm:$0xff] %v459
        %464 = vst [vmem:[%s215 + $0x8] sm:$0xff] %v460
        %465 = vst [vmem:[%s215 + $0x10] sm:$0xff] %v461
        %466 = vst [vmem:[%s215 + $0x18] sm:$0xff] %v462
      $region52: #{conv_block_forward.1} parent=35 // pred_fallthru
        _
      %s467 = smul.u32 %s20, %s19
      %s468 = smul.u32 4, %s467
      %p469 = scmp.lt.s32.totalorder %s468, 3
      %s470 = scalar_select %p469, %s468, 3
      %s471 = smul.addr %s470, 8
      %s472 = scalar_lea.vmem %s4, %s471
      // Predicated region
      $region53: #{conv_block_forward.1} parent=35 // pred_check
        %p473 = pneg %p136
      $region54: #{conv_block_forward.1} parent=35 // pred_check_branch
        %475 = sbr.rel (%p473) target = $region56
      $region55: #{conv_block_forward.1} parent=35 // pred_region
        %s476 = smul.u32 %s20, %s19
        %s477 = smul.u32 4, %s476
      $region56: #{conv_block_forward.1} parent=35 // pred_fallthru
        _
    $region36: #{conv_block_forward.1} parent=5 // pred_fallthru
      _
    %p478 = scmp.le.s32.totalorder 2, %s10
    // Predicated region
    $region57: #{conv_block_forward.1} parent=5 // pred_check
      %p479 = pneg %p478
    $region58: #{conv_block_forward.1} parent=5 // pred_check_branch
      %481 = sbr.rel (%p479) target = $region60
    $region59: #{conv_block_forward.1} parent=5 // pred_region
      %s482 = ssub.s32 %s10, 2
      // Predicated region
      $region61: #{conv_block_forward.1} parent=59 // pred_check
        %p483 = pneg %p142
      $region62: #{conv_block_forward.1} parent=59 // pred_check_branch
        %485 = sbr.rel (%p483) target = $region64
      $region63: #{conv_block_forward.1} parent=59 // pred_region
        %s486 = smul.u32 %s22, %s21
        %s487 = smul.u32 4, %s486
        %p488 = scmp.lt.s32.totalorder %s487, 3
        %s489 = scalar_select %p488, %s487, 3
        %s490 = smul.addr %s489, 8
        %s491 = scalar_lea.vmem %s4, %s490
      $region64: #{conv_block_forward.1} parent=59 // pred_fallthru
        _
    $region60: #{conv_block_forward.1} parent=5 // pred_fallthru
      _
  $region6: #{conv_block_forward.1} parent=0 // loop_footer
    %s14 = sadd.s32 1, %s10
  $region7: #{conv_block_forward.1} parent=0 // loop_footer_branch
    %9 = sbr.rel target = $region3
  $region8: #{conv_block_forward.1} parent=0 // loop_exit
    _

</llo_original>
